<compile_context>
chip_gen: v7x
topology: tpu7x:2x2x1
jax: 0.10.0
libtpu: 0.0.40
codegen_flags: <defaults>
</compile_context>

<pallas_src>
import jax
import jax.numpy as jnp
from jax.experimental import pallas as pl
from jax.experimental.pallas import tpu as pltpu


LANE = 128     # last dim is padded to a multiple of the 128-lane vreg width
SUBLANE = 8    # row-tile granularity


def _round_up(x, m):
    return ((x + m - 1) // m) * m


# ---------------------------------------------------------------------------
# Fused kernel: `num_skip` skipblocks (+ optional down projection) per row tile
# ---------------------------------------------------------------------------
def _make_fused_kernel(num_skip, has_down, mm_dtype):
    def kernel(*refs):
        idx = 0
        x_ref = refs[idx]; idx += 1
        ws_ref = bs_ref = wd_ref = bd_ref = None
        if num_skip > 0:
            ws_ref, bs_ref = refs[idx], refs[idx + 1]; idx += 2
        if has_down:
            wd_ref, bd_ref = refs[idx], refs[idx + 1]; idx += 2
        o_ref = refs[idx]

        # Running activation lives on-chip for the whole chain (f32 epilogue).
        h = x_ref[...].astype(jnp.float32)                      # (TM, Cp_in)

        if num_skip > 0:
            b_all = bs_ref[...]                                 # (num_skip, Cp_in)
            # Static unroll: `number` is small; weights are VMEM-resident.
            for l in range(num_skip):
                y = jnp.dot(h.astype(mm_dtype), ws_ref[l],      # pre-transposed W
                            preferred_element_type=jnp.float32)
                y = jnp.maximum(y + b_all[l][None, :], 0.0)     # bias + ReLU (f32)
                h = y + h                                       # residual add

        if has_down:
            y = jnp.dot(h.astype(mm_dtype), wd_ref[...],
                        preferred_element_type=jnp.float32)
            y = jnp.maximum(y + bd_ref[...], 0.0)
            o_ref[...] = y.astype(o_ref.dtype)
        else:
            o_ref[...] = h.astype(o_ref.dtype)

    return kernel


# ---------------------------------------------------------------------------
# Wrapper: padding, weight packing, BlockSpecs, single pallas_call
# ---------------------------------------------------------------------------
def skip_and_down_block_forward(x, params, *, tm_max=512,
                                matmul_dtype=jnp.bfloat16):
    """Fused Pallas forward of `skip_and_down_block` (activation = ReLU).

    x: (..., in_channels)
    params: {"skip": [(W, b), ...] with W (C, C), b (C,)   [PyTorch layout],
             "down": None or (W, b) with W (out_C, C), b (out_C,)}
    """
    skip = params["skip"]
    down = params["down"]
    num_skip = len(skip)
    has_down = down is not None

    if num_skip == 0 and not has_down:
        return x

    lead_shape = x.shape[:-1]
    in_c = x.shape[-1]
    out_c = down[0].shape[0] if has_down else in_c

    # ---- lane-dense padded channel widths --------------------------------
    cp_in = _round_up(in_c, LANE)
    cp_out = _round_up(out_c, LANE) if has_down else cp_in

    # ---- row tiling -------------------------------------------------------
    h2d = x.reshape(-1, in_c)
    n_rows = h2d.shape[0]
    tm = min(tm_max, _round_up(max(n_rows, SUBLANE), SUBLANE))
    rows_p = _round_up(n_rows, tm)

    x_p = jnp.pad(h2d.astype(jnp.float32),
                  ((0, rows_p - n_rows), (0, cp_in - in_c)))

    # ---- pack parameters (pre-transposed, zero-padded, stacked) -----------
    args = [x_p]
    in_specs = [pl.BlockSpec((tm, cp_in), lambda i: (i, 0))]
    mm_size = jnp.dtype(matmul_dtype).itemsize

    if num_skip > 0:
        ws = jnp.stack([jnp.pad(w.T, ((0, cp_in - in_c), (0, cp_in - in_c)))
                        for w, _ in skip]).astype(matmul_dtype)
        bs = jnp.stack([jnp.pad(b, (0, cp_in - in_c))
                        for _, b in skip]).astype(jnp.float32)
        args += [ws, bs]
        in_specs += [
            pl.BlockSpec((num_skip, cp_in, cp_in), lambda i: (0, 0, 0)),
            pl.BlockSpec((num_skip, cp_in), lambda i: (0, 0)),
        ]

    if has_down:
        wd_raw, bd_raw = down
        wd = jnp.pad(wd_raw.T, ((0, cp_in - in_c),
                                (0, cp_out - out_c))).astype(matmul_dtype)
        bd = jnp.pad(bd_raw, (0, cp_out - out_c)).astype(jnp.float32)
        bd = bd.reshape(1, cp_out)
        args += [wd, bd]
        in_specs += [
            pl.BlockSpec((cp_in, cp_out), lambda i: (0, 0)),
            pl.BlockSpec((1, cp_out), lambda i: (0, 0)),
        ]

    # ---- VMEM budget (explicit so tiling also fits v7x's 64 MiB VMEM) -----
    vmem_bytes = (
        2 * tm * cp_in * 4 + 2 * tm * cp_out * 4            # act in/out, 2x buf
        + 2 * num_skip * (cp_in * cp_in * mm_size + cp_in * 4)
        + (2 * (cp_in * cp_out * mm_size + cp_out * 4) if has_down else 0)
        + 2 * tm * cp_in * 4                                 # headroom for h / y
    )
    vmem_limit = int(min(64 * 1024 * 1024,
                         max(4 * 1024 * 1024, 2 * vmem_bytes)))

    kernel = _make_fused_kernel(num_skip, has_down, matmul_dtype)
    out_p = pl.pallas_call(
        kernel,
        grid=(rows_p // tm,),
        in_specs=in_specs,
        out_specs=pl.BlockSpec((tm, cp_out), lambda i: (i, 0)),
        out_shape=jax.ShapeDtypeStruct((rows_p, cp_out), x.dtype),
        compiler_params=pltpu.CompilerParams(
            dimension_semantics=("parallel",),
            vmem_limit_bytes=vmem_limit),
    )(*args)

    out = out_p[:n_rows, :out_c]
    return out.reshape(*lead_shape, out_c)


# ---------------------------------------------------------------------------
# Deterministic parameter init (mirrors nn.Linear's shapes; uniform init)
# ---------------------------------------------------------------------------
def init_params(key, in_channels, out_channels, number):
    params = {"skip": [], "down": None}
    bound = 1.0 / jnp.sqrt(in_channels)
    for _ in range(number):
        key, kw, kb = jax.random.split(key, 3)
        w = jax.random.uniform(kw, (in_channels, in_channels), jnp.float32,
                               -bound, bound)
        b = jax.random.uniform(kb, (in_channels,), jnp.float32, -bound, bound)
        params["skip"].append((w, b))
    if out_channels is not None:
        key, kw, kb = jax.random.split(key, 3)
        w = jax.random.uniform(kw, (out_channels, in_channels), jnp.float32,
                               -bound, bound)
        b = jax.random.uniform(kb, (out_channels,), jnp.float32, -bound, bound)
        params["down"] = (w, b)
    return params


# ---------------------------------------------------------------------------
# Pure-JAX reference (same bf16-matmul / f32-accumulate numerics as the kernel)
# ---------------------------------------------------------------------------
def reference_forward(x, params, matmul_dtype=jnp.bfloat16):
    h = x.astype(jnp.float32)
    for w, b in params["skip"]:
        y = jnp.dot(h.astype(matmul_dtype), w.T.astype(matmul_dtype),
                    preferred_element_type=jnp.float32) + b
        h = jnp.maximum(y, 0.0) + h
    if params["down"] is not None:
        w, b = params["down"]
        y = jnp.dot(h.astype(matmul_dtype), w.T.astype(matmul_dtype),
                    preferred_element_type=jnp.float32) + b
        h = jnp.maximum(y, 0.0)
    return h


if __name__ == "__main__":
    key = jax.random.PRNGKey(0)
    in_channels = 32
    out_channels = 16
    number = 2

    k_x, k_p = jax.random.split(key)
    # x: (batch=2, seq=8, in_channels=32); Linear acts on the last dim.
    x = jax.random.normal(k_x, (2, 8, in_channels), dtype=jnp.float32)
    params = init_params(k_p, in_channels, out_channels, number)

    out = jax.block_until_ready(skip_and_down_block_forward(x, params))
    ref = reference_forward(x, params)
    assert out.shape == (2, 8, out_channels), out.shape
    assert jnp.allclose(out, ref, atol=1e-4, rtol=1e-4), "mismatch vs reference"

    # Also exercise the "no down projection" branch (out_channels=None).
    params_nd = init_params(jax.random.PRNGKey(1), in_channels, None, 1)
    out2 = jax.block_until_ready(skip_and_down_block_forward(x, params_nd))
    ref2 = reference_forward(x, params_nd)
    assert out2.shape == x.shape, out2.shape
    assert jnp.allclose(out2, ref2, atol=1e-4, rtol=1e-4), "mismatch (no-down)"

    print("KERNEL_OK")
</pallas_src>

<mosaic_0001>
module attributes {stable_mosaic.version = 11 : i64} {
  func.func @kernel(%arg0: i32, %arg1: memref<16x128xf32, #tpu.memory_space<vmem>>, %arg2: memref<2x128x128xbf16, #tpu.memory_space<vmem>>, %arg3: memref<2x128xf32, #tpu.memory_space<vmem>>, %arg4: memref<128x128xbf16, #tpu.memory_space<vmem>>, %arg5: memref<1x128xf32, #tpu.memory_space<vmem>>, %arg6: memref<16x128xf32, #tpu.memory_space<vmem>>) attributes {dimension_semantics = [#tpu.dimension_semantics<parallel>], iteration_bounds = array<i64: 1>, scalar_prefetch = 0 : i64, scratch_operands = 0 : i64, tpu.core_type = #tpu.core_type<tc>, window_params = [{transform_indices = @transform_0, window_bounds = array<i64: 16, 128>}, {pipeline_mode = #tpu.pipeline_mode<synchronous>, transform_indices = @transform_1, window_bounds = array<i64: 2, 128, 128>}, {pipeline_mode = #tpu.pipeline_mode<synchronous>, transform_indices = @transform_2, window_bounds = array<i64: 2, 128>}, {pipeline_mode = #tpu.pipeline_mode<synchronous>, transform_indices = @transform_3, window_bounds = array<i64: 128, 128>}, {pipeline_mode = #tpu.pipeline_mode<synchronous>, transform_indices = @transform_4, window_bounds = array<i64: 1, 128>}, {transform_indices = @transform_5, window_bounds = array<i64: 16, 128>}]} {
    %c0 = arith.constant 0 : index
    %c0_0 = arith.constant 0 : index
    %0 = vector.load %arg1[%c0, %c0_0] : memref<16x128xf32, #tpu.memory_space<vmem>>, vector<16x128xf32>
    %c0_1 = arith.constant 0 : index
    %c0_2 = arith.constant 0 : index
    %1 = vector.load %arg3[%c0_1, %c0_2] : memref<2x128xf32, #tpu.memory_space<vmem>>, vector<2x128xf32>
    %2 = arith.truncf %0 : vector<16x128xf32> to vector<16x128xbf16>
    %c0_3 = arith.constant 0 : index
    %c0_4 = arith.constant 0 : index
    %c0_5 = arith.constant 0 : index
    %3 = vector.load %arg2[%c0_3, %c0_4, %c0_5] : memref<2x128x128xbf16, #tpu.memory_space<vmem>>, vector<1x128x128xbf16>
    %4 = vector.shape_cast %3 : vector<1x128x128xbf16> to vector<128x128xbf16>
    %cst = arith.constant dense<0.000000e+00> : vector<16x128xf32>
    %5 = tpu.matmul %2, %4, %cst {dimension_numbers = #tpu.dot_dimension_numbers<[1], [0], [0], [1], [0, 0, 1, 1], [], []>} : vector<16x128xbf16>, vector<128x128xbf16>, vector<16x128xf32> -> vector<16x128xf32>
    %6 = vector.extract_strided_slice %1 {offsets = [0, 0], sizes = [1, 128], strides = [1, 1]} : vector<2x128xf32> to vector<1x128xf32>
    %7 = vector.shape_cast %6 : vector<1x128xf32> to vector<128xf32>
    %8 = vector.shape_cast %7 : vector<128xf32> to vector<1x128xf32>
    %9 = vector.broadcast %8 : vector<1x128xf32> to vector<16x128xf32>
    %10 = arith.addf %5, %9 : vector<16x128xf32>
    %cst_6 = arith.constant 0.000000e+00 : f32
    %11 = vector.broadcast %cst_6 : f32 to vector<16x128xf32>
    %12 = arith.maximumf %10, %11 : vector<16x128xf32>
    %13 = arith.addf %12, %0 : vector<16x128xf32>
    %14 = arith.truncf %13 : vector<16x128xf32> to vector<16x128xbf16>
    %c1 = arith.constant 1 : index
    %c0_7 = arith.constant 0 : index
    %c0_8 = arith.constant 0 : index
    %15 = vector.load %arg2[%c1, %c0_7, %c0_8] : memref<2x128x128xbf16, #tpu.memory_space<vmem>>, vector<1x128x128xbf16>
    %16 = vector.shape_cast %15 : vector<1x128x128xbf16> to vector<128x128xbf16>
    %cst_9 = arith.constant dense<0.000000e+00> : vector<16x128xf32>
    %17 = tpu.matmul %14, %16, %cst_9 {dimension_numbers = #tpu.dot_dimension_numbers<[1], [0], [0], [1], [0, 0, 1, 1], [], []>} : vector<16x128xbf16>, vector<128x128xbf16>, vector<16x128xf32> -> vector<16x128xf32>
    %18 = vector.extract_strided_slice %1 {offsets = [1, 0], sizes = [1, 128], strides = [1, 1]} : vector<2x128xf32> to vector<1x128xf32>
    %19 = vector.shape_cast %18 : vector<1x128xf32> to vector<128xf32>
    %20 = vector.shape_cast %19 : vector<128xf32> to vector<1x128xf32>
    %21 = vector.broadcast %20 : vector<1x128xf32> to vector<16x128xf32>
    %22 = arith.addf %17, %21 : vector<16x128xf32>
    %cst_10 = arith.constant 0.000000e+00 : f32
    %23 = vector.broadcast %cst_10 : f32 to vector<16x128xf32>
    %24 = arith.maximumf %22, %23 : vector<16x128xf32>
    %25 = arith.addf %24, %13 : vector<16x128xf32>
    %26 = arith.truncf %25 : vector<16x128xf32> to vector<16x128xbf16>
    %c0_11 = arith.constant 0 : index
    %c0_12 = arith.constant 0 : index
    %27 = vector.load %arg4[%c0_11, %c0_12] : memref<128x128xbf16, #tpu.memory_space<vmem>>, vector<128x128xbf16>
    %cst_13 = arith.constant dense<0.000000e+00> : vector<16x128xf32>
    %28 = tpu.matmul %26, %27, %cst_13 {dimension_numbers = #tpu.dot_dimension_numbers<[1], [0], [0], [1], [0, 0, 1, 1], [], []>} : vector<16x128xbf16>, vector<128x128xbf16>, vector<16x128xf32> -> vector<16x128xf32>
    %c0_14 = arith.constant 0 : index
    %c0_15 = arith.constant 0 : index
    %29 = vector.load %arg5[%c0_14, %c0_15] : memref<1x128xf32, #tpu.memory_space<vmem>>, vector<1x128xf32>
    %30 = vector.broadcast %29 : vector<1x128xf32> to vector<16x128xf32>
    %31 = arith.addf %28, %30 : vector<16x128xf32>
    %cst_16 = arith.constant 0.000000e+00 : f32
    %32 = vector.broadcast %cst_16 : f32 to vector<16x128xf32>
    %33 = arith.maximumf %31, %32 : vector<16x128xf32>
    %c0_17 = arith.constant 0 : index
    %c0_18 = arith.constant 0 : index
    %34 = vector.load %arg6[%c0_17, %c0_18] : memref<16x128xf32, #tpu.memory_space<vmem>>, vector<16x128xf32>
    tpu.vector_store %arg6[%c0_17, %c0_18], %33 {strides = array<i32>} : memref<16x128xf32, #tpu.memory_space<vmem>>, vector<16x128xf32>,
    return
  }
  func.func @transform_0(%arg0: i32) -> (i32, i32) {
    %c0_i32 = arith.constant 0 : i32
    %c0_i32_0 = arith.constant 0 : i32
    return %arg0, %c0_i32 : i32, i32
  }
  func.func @transform_1(%arg0: i32) -> (i32, i32, i32) {
    %c0_i32 = arith.constant 0 : i32
    %c0_i32_0 = arith.constant 0 : i32
    %c0_i32_1 = arith.constant 0 : i32
    %c0_i32_2 = arith.constant 0 : i32
    return %c0_i32, %c0_i32_0, %c0_i32_1 : i32, i32, i32
  }
  func.func @transform_2(%arg0: i32) -> (i32, i32) {
    %c0_i32 = arith.constant 0 : i32
    %c0_i32_0 = arith.constant 0 : i32
    %c0_i32_1 = arith.constant 0 : i32
    return %c0_i32, %c0_i32_0 : i32, i32
  }
  func.func @transform_3(%arg0: i32) -> (i32, i32) {
    %c0_i32 = arith.constant 0 : i32
    %c0_i32_0 = arith.constant 0 : i32
    %c0_i32_1 = arith.constant 0 : i32
    return %c0_i32, %c0_i32_0 : i32, i32
  }
  func.func @transform_4(%arg0: i32) -> (i32, i32) {
    %c0_i32 = arith.constant 0 : i32
    %c0_i32_0 = arith.constant 0 : i32
    %c0_i32_1 = arith.constant 0 : i32
    return %c0_i32, %c0_i32_0 : i32, i32
  }
  func.func @transform_5(%arg0: i32) -> (i32, i32) {
    %c0_i32 = arith.constant 0 : i32
    %c0_i32_0 = arith.constant 0 : i32
    return %arg0, %c0_i32 : i32, i32
  }
}

</mosaic_0001>

<llo_original>
// kernel: tpu_custom_call.1
$region0: #{tpu_custom_call.1}
  #allocation0 [shape = 'u32[]', space=smem, size = 0x4, offset = 0x4, fixed_abs, tag = 'smem constant byte address 0x4 - core index']
  #allocation1 [shape = 'u32[144,128]{1,0:T(1,128)}', space=vmem, size = 0x12000, scoped, tag = 'internal scratch']
  %s0 = inlined_call_operand.hbm [shape: f32[16,128], index: 0, kind: input, shape index: {}]
  %s1 = inlined_call_operand.hbm [shape: bf16[2,128,128], index: 1, kind: input, shape index: {}]
  %s2 = inlined_call_operand.vmem [shape: f32[2,128], index: 2, kind: input, shape index: {}]
  %s3 = inlined_call_operand.hbm [shape: bf16[128,128], index: 3, kind: input, shape index: {}]
  %s4 = inlined_call_operand.vmem [shape: f32[1,128], index: 4, kind: input, shape index: {}]
  %s5 = inlined_call_operand.hbm [shape: f32[16,128], index: 5, kind: output, shape index: {}]
  %s6 = sld [smem:[#allocation0]]
  $region42: #{tpu_custom_call.1} parent=0
    _
  %s8 = ssub.s32 1, %s6
  %s9 = scalar_select 0, %s8, %s6
  $region1: #{tpu_custom_call.1} parent=0
    #allocation2 [shape = 'u8[8192]{0}', space=vmem, size = 0x2000, scoped, tag = 'input window, operand 0, single buffered']
    #allocation3 [shape = 's32[1]{0}', space=sflag, size = 0x4, scoped, tag = 'scoped memory for tpu_custom_call.1']
    #allocation4 [shape = 's32[1]{0}', space=sflag, size = 0x4, scoped, tag = 'scoped memory for tpu_custom_call.1']
    #allocation5 [shape = 'u8[65536]{0}', space=vmem, size = 0x10000, scoped, tag = 'input window, operand 1, single buffered']
    #allocation6 [shape = 's32[1]{0}', space=sflag, size = 0x4, scoped, tag = 'scoped memory for tpu_custom_call.1']
    #allocation7 [shape = 'u8[32768]{0}', space=vmem, size = 0x8000, scoped, tag = 'input window, operand 3, single buffered']
    #allocation8 [shape = 'u8[8192]{0}', space=vmem, size = 0x2000, scoped, tag = 'output window, operand 0, single buffered']
    %10 = vsyncpa [#allocation3], 0
    %11 = vsyncpa [#allocation6], 0
    %12 = vsyncpa [#allocation4], 0
    // Predicated region
    $region2: #{tpu_custom_call.1} parent=1 // pred_check
      _
    $region3: #{tpu_custom_call.1} parent=1 // pred_check_branch
      %14 = sbr.rel (0) target = $region5
    $region4: #{tpu_custom_call.1} parent=1 // pred_region
      %s16 = ssub.s32 256, 256
      %17 = vsyncadd [#allocation3], %s16
      %s18 = sshll.u32 [#allocation2], 4
      %s19 = int_to_ptr.vmem [resolvable:$true] %s18
      %24 = dma.hbm_to_vmem [thread:$0]  %s0, 256, %s19, [#allocation3], 128, 128, 8
    $region5: #{tpu_custom_call.1} parent=1 // pred_fallthru
      _
    // Predicated region
    $region6: #{tpu_custom_call.1} parent=1 // pred_check
      _
    $region7: #{tpu_custom_call.1} parent=1 // pred_check_branch
      %26 = sbr.rel (0) target = $region9
    $region8: #{tpu_custom_call.1} parent=1 // pred_region
      %s28 = ssub.s32 2048, 2048
      %29 = vsyncadd [#allocation6], %s28
      %s30 = sshll.u32 [#allocation5], 4
      %s31 = int_to_ptr.vmem [resolvable:$true] %s30
      %36 = dma.hbm_to_vmem [thread:$0]  %s1, 2048, %s31, [#allocation6], 64, 64, 4
    $region9: #{tpu_custom_call.1} parent=1 // pred_fallthru
      _
    // Predicated region
    $region10: #{tpu_custom_call.1} parent=1 // pred_check
      _
    $region11: #{tpu_custom_call.1} parent=1 // pred_check_branch
      %38 = sbr.rel (0) target = $region13
    $region12: #{tpu_custom_call.1} parent=1 // pred_region
      _
    $region13: #{tpu_custom_call.1} parent=1 // pred_fallthru
      _
    // Predicated region
    $region14: #{tpu_custom_call.1} parent=1 // pred_check
      _
    $region15: #{tpu_custom_call.1} parent=1 // pred_check_branch
      %40 = sbr.rel (0) target = $region17
    $region16: #{tpu_custom_call.1} parent=1 // pred_region
      %s42 = ssub.s32 1024, 1024
      %43 = vsyncadd [#allocation6], %s42
      %s44 = sshll.u32 [#allocation7], 4
      %s45 = int_to_ptr.vmem [resolvable:$true] %s44
      %50 = dma.hbm_to_vmem [thread:$0]  %s3, 1024, %s45, [#allocation6], 64, 64, 4
    $region17: #{tpu_custom_call.1} parent=1 // pred_fallthru
      _
    // Predicated region
    $region18: #{tpu_custom_call.1} parent=1 // pred_check
      _
    $region19: #{tpu_custom_call.1} parent=1 // pred_check_branch
      %52 = sbr.rel (0) target = $region21
    $region20: #{tpu_custom_call.1} parent=1 // pred_region
      _
    $region21: #{tpu_custom_call.1} parent=1 // pred_fallthru
      _
    // Predicated region
    $region22: #{tpu_custom_call.1} parent=1 // pred_check
      _
    $region23: #{tpu_custom_call.1} parent=1 // pred_check_branch
      %54 = sbr.rel (0) target = $region25
    $region24: #{tpu_custom_call.1} parent=1 // pred_region
      %55 = dma.done [#allocation3], 256
    $region25: #{tpu_custom_call.1} parent=1 // pred_fallthru
      _
    // Predicated region
    $region26: #{tpu_custom_call.1} parent=1 // pred_check
      _
    $region27: #{tpu_custom_call.1} parent=1 // pred_check_branch
      %57 = sbr.rel (0) target = $region29
    $region28: #{tpu_custom_call.1} parent=1 // pred_region
      %58 = dma.done [#allocation6], 2048
    $region29: #{tpu_custom_call.1} parent=1 // pred_fallthru
      _
    // Predicated region
    $region30: #{tpu_custom_call.1} parent=1 // pred_check
      _
    $region31: #{tpu_custom_call.1} parent=1 // pred_check_branch
      %60 = sbr.rel (0) target = $region33
    $region32: #{tpu_custom_call.1} parent=1 // pred_region
      %61 = dma.done [#allocation6], 1024
    $region33: #{tpu_custom_call.1} parent=1 // pred_fallthru
      _
    %v63 = vld [vmem:[#allocation2] sm:$0xff]
    %v64 = vld [vmem:[#allocation2 + $0x8] sm:$0xff]
    %v65 = vld [vmem:[%s2] sm:$0x3]
    %v66 = vpack.c.bf16 %v64, %v63
    %v67 = vld [vmem:[#allocation5] sm:$0xf]
    %v68 = vld [vmem:[#allocation5 + $0x4] sm:$0xf]
    %v69 = vld [vmem:[#allocation5 + $0x8] sm:$0xf]
    %v70 = vld [vmem:[#allocation5 + $0xc] sm:$0xf]
    %v71 = vld [vmem:[#allocation5 + $0x10] sm:$0xf]
    %v72 = vld [vmem:[#allocation5 + $0x14] sm:$0xf]
    %v73 = vld [vmem:[#allocation5 + $0x18] sm:$0xf]
    %v74 = vld [vmem:[#allocation5 + $0x1c] sm:$0xf]
    %v75 = vld [vmem:[#allocation5 + $0x20] sm:$0xf]
    %v76 = vld [vmem:[#allocation5 + $0x24] sm:$0xf]
    %v77 = vld [vmem:[#allocation5 + $0x28] sm:$0xf]
    %v78 = vld [vmem:[#allocation5 + $0x2c] sm:$0xf]
    %v79 = vld [vmem:[#allocation5 + $0x30] sm:$0xf]
    %v80 = vld [vmem:[#allocation5 + $0x34] sm:$0xf]
    %v81 = vld [vmem:[#allocation5 + $0x38] sm:$0xf]
    %v82 = vld [vmem:[#allocation5 + $0x3c] sm:$0xf]
    %v83 = vlaneseq
    %v84 = vshrl.u32 %v83, 7
    %v85 = vsub.s32 0, %v84
    %v86 = vrot.slane %v65, %v85
    %v103 = vunpack.c.l.b16 %v67
    %v104 = vunpack.c.l.b16 %v68
    %v105 = vunpack.c.l.b16 %v69
    %v106 = vunpack.c.l.b16 %v70
    %v107 = vunpack.c.l.b16 %v71
    %v108 = vunpack.c.l.b16 %v72
    %v109 = vunpack.c.l.b16 %v73
    %v110 = vunpack.c.l.b16 %v74
    %v111 = vunpack.c.l.b16 %v75
    %v112 = vunpack.c.l.b16 %v76
    %v113 = vunpack.c.l.b16 %v77
    %v114 = vunpack.c.l.b16 %v78
    %v115 = vunpack.c.l.b16 %v79
    %v116 = vunpack.c.l.b16 %v80
    %v117 = vunpack.c.l.b16 %v81
    %v118 = vunpack.c.l.b16 %v82
    %v119 = vpack.c.b16 %v104, %v103
    %v120 = vpack.c.b16 %v106, %v105
    %v121 = vpack.c.b16 %v108, %v107
    %v122 = vpack.c.b16 %v110, %v109
    %v123 = vpack.c.b16 %v112, %v111
    %v124 = vpack.c.b16 %v114, %v113
    %v125 = vpack.c.b16 %v116, %v115
    %v126 = vpack.c.b16 %v118, %v117
    %135 = vmatprep.subr.bf16.mxu0 0
    %136 = vmatpush1.bf16.msra.mxu0 %v119
    %137 = vmatprep.subr.bf16.mxu0 0
    %138 = vmatpush1.bf16.msra.mxu0 %v120
    %139 = vmatprep.subr.bf16.mxu0 0
    %140 = vmatpush1.bf16.msra.mxu0 %v121
    %141 = vmatprep.subr.bf16.mxu0 0
    %142 = vmatpush1.bf16.msra.mxu0 %v122
    %143 = vmatprep.subr.bf16.mxu0 0
    %144 = vmatpush1.bf16.msra.mxu0 %v123
    %145 = vmatprep.subr.bf16.mxu0 0
    %146 = vmatpush1.bf16.msra.mxu0 %v124
    %147 = vmatprep.subr.bf16.mxu0 0
    %148 = vmatpush1.bf16.msra.mxu0 %v125
    %149 = vmatprep.subr.bf16.mxu0 0
    %150 = vmatpush1.bf16.msra.mxu0 %v126
    %151 = vmatprep.subr.bf16.mxu0 0
    %152 = vmatpush1.bf16.msra.mxu0 0
    %153 = vmatprep.subr.bf16.mxu0 0
    %154 = vmatpush1.bf16.msra.mxu0 0
    %155 = vmatprep.subr.bf16.mxu0 0
    %156 = vmatpush1.bf16.msra.mxu0 0
    %157 = vmatprep.subr.bf16.mxu0 0
    %158 = vmatpush1.bf16.msra.mxu0 0
    %159 = vmatprep.subr.bf16.mxu0 0
    %160 = vmatpush1.bf16.msra.mxu0 0
    %161 = vmatprep.subr.bf16.mxu0 0
    %162 = vmatpush1.bf16.msra.mxu0 0
    %163 = vmatprep.subr.bf16.mxu0 0
    %164 = vmatpush1.bf16.msra.mxu0 0
    %165 = vmatprep.subr.bf16.mxu0 0
    %166 = vmatpush1.bf16.msra.mxu0 0
    %167 = vmatprep.mubr.bf16.mxu0 0
    %168 = vmatmul.mubr.bf16.gmra.mrb[0].mxu0 %v66
    %v169 = vpop.f32.mrb[0].mxu0
    %v170 = vadd.f32 %v86, %v169
    %v171 = vpop.f32.mrb[0].mxu0
    %v172 = vpop.f32.mrb[0].mxu0
    %v173 = vadd.f32 %v86, %v172
    %v174 = vpop.f32.mrb[0].mxu0
    %175 = vdwg.mxu0
    %v176 = vmax.f32 %v170, 0.0
    %v177 = vmax.f32 %v173, 0.0
    %v178 = vadd.f32 %v176, %v63
    %v179 = vadd.f32 %v177, %v64
    %v180 = vpack.c.bf16 %v179, %v178
    %s181 = scalar_lea.vmem [#allocation5], 64
    %v182 = vld [vmem:[%s181] sm:$0xf]
    %v183 = vld [vmem:[%s181 + $0x4] sm:$0xf]
    %v184 = vld [vmem:[%s181 + $0x8] sm:$0xf]
    %v185 = vld [vmem:[%s181 + $0xc] sm:$0xf]
    %v186 = vld [vmem:[%s181 + $0x10] sm:$0xf]
    %v187 = vld [vmem:[%s181 + $0x14] sm:$0xf]
    %v188 = vld [vmem:[%s181 + $0x18] sm:$0xf]
    %v189 = vld [vmem:[%s181 + $0x1c] sm:$0xf]
    %v190 = vld [vmem:[%s181 + $0x20] sm:$0xf]
    %v191 = vld [vmem:[%s181 + $0x24] sm:$0xf]
    %v192 = vld [vmem:[%s181 + $0x28] sm:$0xf]
    %v193 = vld [vmem:[%s181 + $0x2c] sm:$0xf]
    %v194 = vld [vmem:[%s181 + $0x30] sm:$0xf]
    %v195 = vld [vmem:[%s181 + $0x34] sm:$0xf]
    %v196 = vld [vmem:[%s181 + $0x38] sm:$0xf]
    %v197 = vld [vmem:[%s181 + $0x3c] sm:$0xf]
    %v198 = vlaneseq
    %v199 = vshrl.u32 %v198, 7
    %v200 = vsub.s32 1, %v199
    %v201 = vrot.slane %v65, %v200
    %v218 = vunpack.c.l.b16 %v182
    %v219 = vunpack.c.l.b16 %v183
    %v220 = vunpack.c.l.b16 %v184
    %v221 = vunpack.c.l.b16 %v185
    %v222 = vunpack.c.l.b16 %v186
    %v223 = vunpack.c.l.b16 %v187
    %v224 = vunpack.c.l.b16 %v188
    %v225 = vunpack.c.l.b16 %v189
    %v226 = vunpack.c.l.b16 %v190
    %v227 = vunpack.c.l.b16 %v191
    %v228 = vunpack.c.l.b16 %v192
    %v229 = vunpack.c.l.b16 %v193
    %v230 = vunpack.c.l.b16 %v194
    %v231 = vunpack.c.l.b16 %v195
    %v232 = vunpack.c.l.b16 %v196
    %v233 = vunpack.c.l.b16 %v197
    %v234 = vpack.c.b16 %v219, %v218
    %v235 = vpack.c.b16 %v221, %v220
    %v236 = vpack.c.b16 %v223, %v222
    %v237 = vpack.c.b16 %v225, %v224
    %v238 = vpack.c.b16 %v227, %v226
    %v239 = vpack.c.b16 %v229, %v228
    %v240 = vpack.c.b16 %v231, %v230
    %v241 = vpack.c.b16 %v233, %v232
    %250 = vmatprep.subr.bf16.mxu0 0
    %251 = vmatpush1.bf16.msra.mxu0 %v234
    %252 = vmatprep.subr.bf16.mxu0 0
    %253 = vmatpush1.bf16.msra.mxu0 %v235
    %254 = vmatprep.subr.bf16.mxu0 0
    %255 = vmatpush1.bf16.msra.mxu0 %v236
    %256 = vmatprep.subr.bf16.mxu0 0
    %257 = vmatpush1.bf16.msra.mxu0 %v237
    %258 = vmatprep.subr.bf16.mxu0 0
    %259 = vmatpush1.bf16.msra.mxu0 %v238
    %260 = vmatprep.subr.bf16.mxu0 0
    %261 = vmatpush1.bf16.msra.mxu0 %v239
    %262 = vmatprep.subr.bf16.mxu0 0
    %263 = vmatpush1.bf16.msra.mxu0 %v240
    %264 = vmatprep.subr.bf16.mxu0 0
    %265 = vmatpush1.bf16.msra.mxu0 %v241
    %266 = vmatprep.subr.bf16.mxu0 0
    %267 = vmatpush1.bf16.msra.mxu0 0
    %268 = vmatprep.subr.bf16.mxu0 0
    %269 = vmatpush1.bf16.msra.mxu0 0
    %270 = vmatprep.subr.bf16.mxu0 0
    %271 = vmatpush1.bf16.msra.mxu0 0
    %272 = vmatprep.subr.bf16.mxu0 0
    %273 = vmatpush1.bf16.msra.mxu0 0
    %274 = vmatprep.subr.bf16.mxu0 0
    %275 = vmatpush1.bf16.msra.mxu0 0
    %276 = vmatprep.subr.bf16.mxu0 0
    %277 = vmatpush1.bf16.msra.mxu0 0
    %278 = vmatprep.subr.bf16.mxu0 0
    %279 = vmatpush1.bf16.msra.mxu0 0
    %280 = vmatprep.subr.bf16.mxu0 0
    %281 = vmatpush1.bf16.msra.mxu0 0
    %282 = vmatprep.mubr.bf16.mxu0 0
    %283 = vmatmul.mubr.bf16.gmra.mrb[0].mxu0 %v180
    %v284 = vpop.f32.mrb[0].mxu0
    %v285 = vadd.f32 %v201, %v284
    %v286 = vpop.f32.mrb[0].mxu0
    %v287 = vpop.f32.mrb[0].mxu0
    %v288 = vadd.f32 %v201, %v287
    %v289 = vpop.f32.mrb[0].mxu0
    %290 = vdwg.mxu0
    %v291 = vmax.f32 %v285, 0.0
    %v292 = vmax.f32 %v288, 0.0
    %v293 = vadd.f32 %v291, %v178
    %v294 = vadd.f32 %v292, %v179
    %v295 = vpack.c.bf16 %v294, %v293
    %v296 = vld [vmem:[#allocation7] sm:$0xf]
    %v297 = vld [vmem:[#allocation7 + $0x4] sm:$0xf]
    %v298 = vld [vmem:[#allocation7 + $0x8] sm:$0xf]
    %v299 = vld [vmem:[#allocation7 + $0xc] sm:$0xf]
    %v300 = vld [vmem:[#allocation7 + $0x10] sm:$0xf]
    %v301 = vld [vmem:[#allocation7 + $0x14] sm:$0xf]
    %v302 = vld [vmem:[#allocation7 + $0x18] sm:$0xf]
    %v303 = vld [vmem:[#allocation7 + $0x1c] sm:$0xf]
    %v304 = vld [vmem:[#allocation7 + $0x20] sm:$0xf]
    %v305 = vld [vmem:[#allocation7 + $0x24] sm:$0xf]
    %v306 = vld [vmem:[#allocation7 + $0x28] sm:$0xf]
    %v307 = vld [vmem:[#allocation7 + $0x2c] sm:$0xf]
    %v308 = vld [vmem:[#allocation7 + $0x30] sm:$0xf]
    %v309 = vld [vmem:[#allocation7 + $0x34] sm:$0xf]
    %v310 = vld [vmem:[#allocation7 + $0x38] sm:$0xf]
    %v311 = vld [vmem:[#allocation7 + $0x3c] sm:$0xf]
    %v312 = vld [vmem:[%s4] sm:$0x1]
    %v314 = vlaneseq
    %v315 = vshrl.u32 %v314, 7
    %v316 = vsub.s32 0, %v315
    %v317 = vrot.slane %v312, %v316
    %v335 = vunpack.c.l.b16 %v296
    %v336 = vunpack.c.l.b16 %v297
    %v337 = vunpack.c.l.b16 %v298
    %v338 = vunpack.c.l.b16 %v299
    %v339 = vunpack.c.l.b16 %v300
    %v340 = vunpack.c.l.b16 %v301
    %v341 = vunpack.c.l.b16 %v302
    %v342 = vunpack.c.l.b16 %v303
    %v343 = vunpack.c.l.b16 %v304
    %v344 = vunpack.c.l.b16 %v305
    %v345 = vunpack.c.l.b16 %v306
    %v346 = vunpack.c.l.b16 %v307
    %v347 = vunpack.c.l.b16 %v308
    %v348 = vunpack.c.l.b16 %v309
    %v349 = vunpack.c.l.b16 %v310
    %v350 = vunpack.c.l.b16 %v311
    %v351 = vpack.c.b16 %v336, %v335
    %v352 = vpack.c.b16 %v338, %v337
    %v353 = vpack.c.b16 %v340, %v339
    %v354 = vpack.c.b16 %v342, %v341
    %v355 = vpack.c.b16 %v344, %v343
    %v356 = vpack.c.b16 %v346, %v345
    %v357 = vpack.c.b16 %v348, %v347
    %v358 = vpack.c.b16 %v350, %v349
    %367 = vmatprep.subr.bf16.mxu0 0
    %368 = vmatpush1.bf16.msra.mxu0 %v351
    %369 = vmatprep.subr.bf16.mxu0 0
    %370 = vmatpush1.bf16.msra.mxu0 %v352
    %371 = vmatprep.subr.bf16.mxu0 0
    %372 = vmatpush1.bf16.msra.mxu0 %v353
    %373 = vmatprep.subr.bf16.mxu0 0
    %374 = vmatpush1.bf16.msra.mxu0 %v354
    %375 = vmatprep.subr.bf16.mxu0 0
    %376 = vmatpush1.bf16.msra.mxu0 %v355
    %377 = vmatprep.subr.bf16.mxu0 0
    %378 = vmatpush1.bf16.msra.mxu0 %v356
    %379 = vmatprep.subr.bf16.mxu0 0
    %380 = vmatpush1.bf16.msra.mxu0 %v357
    %381 = vmatprep.subr.bf16.mxu0 0
    %382 = vmatpush1.bf16.msra.mxu0 %v358
    %383 = vmatprep.subr.bf16.mxu0 0
    %384 = vmatpush1.bf16.msra.mxu0 0
    %385 = vmatprep.subr.bf16.mxu0 0
    %386 = vmatpush1.bf16.msra.mxu0 0
    %387 = vmatprep.subr.bf16.mxu0 0
    %388 = vmatpush1.bf16.msra.mxu0 0
    %389 = vmatprep.subr.bf16.mxu0 0
    %390 = vmatpush1.bf16.msra.mxu0 0
    %391 = vmatprep.subr.bf16.mxu0 0
    %392 = vmatpush1.bf16.msra.mxu0 0
    %393 = vmatprep.subr.bf16.mxu0 0
    %394 = vmatpush1.bf16.msra.mxu0 0
    %395 = vmatprep.subr.bf16.mxu0 0
    %396 = vmatpush1.bf16.msra.mxu0 0
    %397 = vmatprep.subr.bf16.mxu0 0
    %398 = vmatpush1.bf16.msra.mxu0 0
    %399 = vmatprep.mubr.bf16.mxu0 0
    %400 = vmatmul.mubr.bf16.gmra.mrb[0].mxu0 %v295
    %v401 = vpop.f32.mrb[0].mxu0
    %v402 = vadd.f32 %v317, %v401
    %v403 = vpop.f32.mrb[0].mxu0
    %v404 = vpop.f32.mrb[0].mxu0
    %v405 = vadd.f32 %v317, %v404
    %v406 = vpop.f32.mrb[0].mxu0
    %407 = vdwg.mxu0
    %v408 = vmax.f32 %v402, 0.0
    %v409 = vmax.f32 %v405, 0.0
    %410 = vst [vmem:[#allocation8] sm:$0xff] %v408
    %411 = vst [vmem:[#allocation8 + $0x8] sm:$0xff] %v409
    // Predicated region
    $region34: #{tpu_custom_call.1} parent=1 // pred_check
      _
    $region35: #{tpu_custom_call.1} parent=1 // pred_check_branch
      %413 = sbr.rel (0) target = $region37
    $region36: #{tpu_custom_call.1} parent=1 // pred_region
      %s415 = ssub.s32 256, 256
      %416 = vsyncadd [#allocation4], %s415
      %s417 = sshll.u32 [#allocation8], 4
      %s418 = int_to_ptr.vmem [resolvable:$true] %s417
      %423 = dma.vmem_to_hbm [thread:$0]  %s418, 256, %s5, [#allocation4], 128, 128, 8
    $region37: #{tpu_custom_call.1} parent=1 // pred_fallthru
      _
    // Predicated region
    $region38: #{tpu_custom_call.1} parent=1 // pred_check
      _
    $region39: #{tpu_custom_call.1} parent=1 // pred_check_branch
      %425 = sbr.rel (0) target = $region41
    $region40: #{tpu_custom_call.1} parent=1 // pred_region
      %426 = dma.done [#allocation4], 256
    $region41: #{tpu_custom_call.1} parent=1 // pred_fallthru
      _
    %427 = vsyncpa [#allocation3], 1
    %428 = vsyncpa [#allocation6], 1
    %429 = vsyncpa [#allocation4], 1

</llo_original>
